<compile_context>
chip_gen: v6e
topology: v6e:2x2x1
jax: 0.10.0
libtpu: 0.0.40
codegen_flags: <defaults>
</compile_context>

<pallas_src>
import jax
import jax.numpy as jnp
from jax.experimental import pallas as pl
from jax.experimental.pallas import tpu as pltpu


def _round_up(x, m):
    return ((x + m - 1) // m) * m


def _cdiv(a, b):
    return -(-a // b)


def _chip_defaults():
    """(block_bytes per input block, vmem_limit_bytes or None) by TPU generation."""
    try:
        kind = jax.devices()[0].device_kind.lower()
    except Exception:
        kind = ""
    if "v7" in kind:
        # 2 inputs x 2 bufs x 6 MiB = 24 MiB; 48 MiB limit < 64 MiB physical.
        return 6 * 1024 * 1024, 48 * 1024 * 1024
    if "v6" in kind or "trillium" in kind:
        # 2 x 2 x 4 MiB = 16 MiB; 48 MiB limit, 128 MiB physical.
        return 4 * 1024 * 1024, 48 * 1024 * 1024
    # v5e / unknown: stay under the 16 MiB scoped-VMEM default.
    return 2 * 1024 * 1024, None


def _make_kernel(B, D, tile_b, tile_d, mask_rows, mask_cols):
    def kernel(out_ref, label_ref, w_ref, part_ref):
        i = pl.program_id(0)
        j = pl.program_id(1)

        # Inner axis (D tiles) is the carried reduction: zero the resident
        # accumulator block on its first step.
        @pl.when(j == 0)
        def _():
            part_ref[...] = jnp.zeros_like(part_ref)

        diff = out_ref[...].astype(jnp.float32) - label_ref[...].astype(jnp.float32)

        # Resident weight slab; slice the current lane window (aligned start).
        d_start = pl.multiple_of(j * tile_d, 128)
        w = w_ref[:, pl.ds(d_start, tile_d)]            # (1, tile_d)
        weighted = (diff * diff) * w                    # (tile_b, tile_d)

        # Ragged-edge masking (only emitted when B or D does not divide the
        # tile): out-of-bounds elements may be garbage (even NaN), so mask the
        # weighted term itself -- zero weights alone would not neutralize NaN.
        if mask_rows or mask_cols:
            ok = None
            if mask_rows:
                rows = jax.lax.broadcasted_iota(jnp.int32, (tile_b, tile_d), 0)
                ok = (i * tile_b + rows) < B
            if mask_cols:
                cols = jax.lax.broadcasted_iota(jnp.int32, (tile_b, tile_d), 1)
                cmask = (j * tile_d + cols) < D
                ok = cmask if ok is None else (ok & cmask)
            weighted = jnp.where(ok, weighted, 0.0)

        # Fold sublane groups of 8 with pure vreg adds (no cross-sublane XLU,
        # and the (8, tile_d) writeback is a clean aligned store).
        part_ref[...] += jnp.sum(weighted.reshape(tile_b // 8, 8, tile_d), axis=0)

    return kernel


def weighted_mse_loss_withscale(out, label, weights, *, tile_b=None, tile_d=None,
                                block_bytes=None):
    """mean((out - label)**2 * weights[None, :]) as a Pallas TPU kernel.

    out, label: (B, D) arrays (any float dtype; upcast to f32 in-kernel)
    weights:    (D,) array
    Returns a scalar float32.
    """
    B, D = out.shape
    assert label.shape == (B, D)
    assert weights.shape == (D,)

    chip_block_bytes, vmem_limit = _chip_defaults()
    if block_bytes is None:
        block_bytes = chip_block_bytes

    itemsize = jnp.dtype(out.dtype).itemsize

    # Fold the mean's 1/(B*D) into the weights on the host (free micro-win).
    inv_total = 1.0 / float(B * D)
    w = weights.astype(jnp.float32) * jnp.float32(inv_total)

    # ---- tile selection ---------------------------------------------------
    # Lane axis: multiples of 128; block very wide D instead of shrinking tile_b.
    if tile_d is None:
        tile_d = min(_round_up(D, 128), 2048)
    tile_d = _round_up(tile_d, 128)
    nd = _cdiv(D, tile_d)
    Dp = nd * tile_d

    # Batch axis: multiple of 8 sublanes, ~block_bytes per input block
    # (dtype-aware), capped so nb >= 2 when possible (megacore / v7x split).
    if tile_b is None:
        target_rows = max(8, block_bytes // (tile_d * itemsize))
        tile_b = min(_round_up(B, 8), _round_up(target_rows, 8))
        if B > 8:
            half = _round_up(_cdiv(B, 2), 8)
            tile_b = min(tile_b, half)
    tile_b = max(8, _round_up(tile_b, 8))
    nb = _cdiv(B, tile_b)

    mask_rows = (nb * tile_b) != B
    mask_cols = (nd * tile_d) != D

    # Only the tiny weights vector is padded (so the resident slab's in-kernel
    # pl.ds slice never goes out of bounds); the big inputs are NOT padded.
    if Dp != D:
        w = jnp.pad(w, (0, Dp - D))
    w2d = w.reshape(1, Dp)

    kernel = _make_kernel(B, D, tile_b, tile_d, mask_rows, mask_cols)

    cost = pl.CostEstimate(
        flops=4 * B * D,
        transcendentals=0,
        bytes_accessed=2 * B * D * itemsize + Dp * 4 + nb * 8 * tile_d * 4,
    )

    cp_kwargs = dict(dimension_semantics=("parallel", "arbitrary"))
    if vmem_limit is not None:
        cp_kwargs["vmem_limit_bytes"] = vmem_limit

    partials = pl.pallas_call(
        kernel,
        out_shape=jax.ShapeDtypeStruct((nb * 8, tile_d), jnp.float32),
        grid_spec=pltpu.PrefetchScalarGridSpec(
            num_scalar_prefetch=0,
            grid=(nb, nd),
            in_specs=[
                pl.BlockSpec((tile_b, tile_d), lambda i, j: (i, j)),
                pl.BlockSpec((tile_b, tile_d), lambda i, j: (i, j)),
                pl.BlockSpec((1, Dp), lambda i, j: (0, 0)),   # resident weights
            ],
            out_specs=pl.BlockSpec((8, tile_d), lambda i, j: (i, 0)),
        ),
        compiler_params=pltpu.CompilerParams(**cp_kwargs),
        cost_estimate=cost,
    )(out, label, w2d)

    # Tiny final reduce (already scaled by 1/(B*D) via the weights).
    return jnp.sum(partials)


if __name__ == "__main__":
    key = jax.random.PRNGKey(0)
    k1, k2, k3 = jax.random.split(key, 3)

    # Small shapes consistent with the module: (batch, feature) + (feature,) weights.
    B, D = 8, 128
    out = jax.random.normal(k1, (B, D), dtype=jnp.float32)
    label = jax.random.normal(k2, (B, D), dtype=jnp.float32)
    weights = jax.random.uniform(k3, (D,), dtype=jnp.float32)

    loss = jax.block_until_ready(weighted_mse_loss_withscale(out, label, weights))
    ref = jnp.mean((out - label) ** 2 * weights[None, :])
    assert jnp.allclose(loss, ref, rtol=1e-5, atol=1e-6), (loss, ref)

    # Non-aligned shapes exercise the in-kernel ragged-edge masking path
    # (no host-side padding of the big inputs).
    B2, D2 = 10, 130
    out2 = jax.random.normal(k1, (B2, D2), dtype=jnp.float32)
    label2 = jax.random.normal(k2, (B2, D2), dtype=jnp.float32)
    weights2 = jax.random.uniform(k3, (D2,), dtype=jnp.float32)
    loss2 = jax.block_until_ready(weighted_mse_loss_withscale(out2, label2, weights2))
    ref2 = jnp.mean((out2 - label2) ** 2 * weights2[None, :])
    assert jnp.allclose(loss2, ref2, rtol=1e-5, atol=1e-6), (loss2, ref2)

    print("KERNEL_OK")
</pallas_src>

<mosaic_0001>
module attributes {stable_mosaic.version = 11 : i64} {
  func.func @kernel(%arg0: i32, %arg1: i32, %arg2: memref<8x128xf32, #tpu.memory_space<vmem>>, %arg3: memref<8x128xf32, #tpu.memory_space<vmem>>, %arg4: memref<1x128xf32, #tpu.memory_space<vmem>>, %arg5: memref<8x128xf32, #tpu.memory_space<vmem>>) attributes {dimension_semantics = [#tpu.dimension_semantics<parallel>, #tpu.dimension_semantics<arbitrary>], iteration_bounds = array<i64: 1, 1>, scalar_prefetch = 0 : i64, scratch_operands = 0 : i64, tpu.core_type = #tpu.core_type<tc>, window_params = [{transform_indices = @transform_0, window_bounds = array<i64: 8, 128>}, {transform_indices = @transform_1, window_bounds = array<i64: 8, 128>}, {pipeline_mode = #tpu.pipeline_mode<synchronous>, transform_indices = @transform_2, window_bounds = array<i64: 1, 128>}, {transform_indices = @transform_3, window_bounds = array<i64: 8, 128>}]} {
    %c0_i32 = arith.constant 0 : i32
    %0 = arith.cmpi eq, %arg1, %c0_i32 : i32
    %1 = arith.extui %0 : i1 to i32
    %c0_i32_0 = arith.constant 0 : i32
    %2 = arith.cmpi ne, %1, %c0_i32_0 : i32
    scf.if %2 {
      %cst_9 = arith.constant 0.000000e+00 : f32
      %18 = vector.broadcast %cst_9 : f32 to vector<8x128xf32>
      %c0_10 = arith.constant 0 : index
      %c0_11 = arith.constant 0 : index
      %19 = vector.load %arg5[%c0_10, %c0_11] : memref<8x128xf32, #tpu.memory_space<vmem>>, vector<8x128xf32>
      tpu.vector_store %arg5[%c0_10, %c0_11], %18 {strides = array<i32>} : memref<8x128xf32, #tpu.memory_space<vmem>>, vector<8x128xf32>,
    } else {
    }
    %c0 = arith.constant 0 : index
    %c0_1 = arith.constant 0 : index
    %3 = vector.load %arg2[%c0, %c0_1] : memref<8x128xf32, #tpu.memory_space<vmem>>, vector<8x128xf32>
    %c0_2 = arith.constant 0 : index
    %c0_3 = arith.constant 0 : index
    %4 = vector.load %arg3[%c0_2, %c0_3] : memref<8x128xf32, #tpu.memory_space<vmem>>, vector<8x128xf32>
    %5 = arith.subf %3, %4 : vector<8x128xf32>
    %c128_i32 = arith.constant 128 : i32
    %6 = arith.muli %arg1, %c128_i32 : i32
    %7 = tpu.assume_multiple %6, 128 : i32
    %c0_4 = arith.constant 0 : index
    %8 = arith.index_cast %7 : i32 to index
    %9 = vector.load %arg4[%c0_4, %8] : memref<1x128xf32, #tpu.memory_space<vmem>>, vector<1x128xf32>
    %10 = arith.mulf %5, %5 : vector<8x128xf32>
    %11 = vector.broadcast %9 : vector<1x128xf32> to vector<8x128xf32>
    %12 = arith.mulf %10, %11 : vector<8x128xf32>
    %c0_5 = arith.constant 0 : index
    %c0_6 = arith.constant 0 : index
    %13 = vector.load %arg5[%c0_5, %c0_6] : memref<8x128xf32, #tpu.memory_space<vmem>>, vector<8x128xf32>
    %14 = vector.shape_cast %12 : vector<8x128xf32> to vector<1x8x128xf32>
    %cst = arith.constant dense<0.000000e+00> : vector<8x128xf32>
    %15 = vector.multi_reduction <add>, %14, %cst [0] : vector<1x8x128xf32> to vector<8x128xf32>
    %16 = arith.addf %13, %15 : vector<8x128xf32>
    %c0_7 = arith.constant 0 : index
    %c0_8 = arith.constant 0 : index
    %17 = vector.load %arg5[%c0_7, %c0_8] : memref<8x128xf32, #tpu.memory_space<vmem>>, vector<8x128xf32>
    tpu.vector_store %arg5[%c0_7, %c0_8], %16 {strides = array<i32>} : memref<8x128xf32, #tpu.memory_space<vmem>>, vector<8x128xf32>,
    return
  }
  func.func @transform_0(%arg0: i32, %arg1: i32) -> (i32, i32) {
    %c0_i32 = arith.constant 0 : i32
    return %arg0, %arg1 : i32, i32
  }
  func.func @transform_1(%arg0: i32, %arg1: i32) -> (i32, i32) {
    %c0_i32 = arith.constant 0 : i32
    return %arg0, %arg1 : i32, i32
  }
  func.func @transform_2(%arg0: i32, %arg1: i32) -> (i32, i32) {
    %c0_i32 = arith.constant 0 : i32
    %c0_i32_0 = arith.constant 0 : i32
    %c0_i32_1 = arith.constant 0 : i32
    return %c0_i32, %c0_i32_0 : i32, i32
  }
  func.func @transform_3(%arg0: i32, %arg1: i32) -> (i32, i32) {
    %c0_i32 = arith.constant 0 : i32
    %c0_i32_0 = arith.constant 0 : i32
    return %arg0, %c0_i32 : i32, i32
  }
}

</mosaic_0001>

<llo_original>
// kernel: tpu_custom_call.1
$region0: #{tpu_custom_call.1}
  #allocation0 [shape = 'u32[]', space=smem, size = 0x4, offset = 0x4, fixed_abs, tag = 'smem constant byte address 0x4 - core index']
  #allocation1 [shape = 'u32[144,128]{1,0:T(1,128)}', space=vmem, size = 0x12000, scoped, tag = 'internal scratch']
  %s0 = inlined_call_operand.hbm [shape: f32[8,128], index: 0, kind: input, shape index: {}]
  %s1 = inlined_call_operand.hbm [shape: f32[8,128], index: 1, kind: input, shape index: {}]
  %s2 = inlined_call_operand.vmem [shape: f32[1,128], index: 2, kind: input, shape index: {}]
  %s3 = inlined_call_operand.hbm [shape: f32[8,128], index: 3, kind: output, shape index: {}]
  %s4 = sld [smem:[#allocation0]]
  $region34: #{tpu_custom_call.1} parent=0
    _
  %s6 = ssub.s32 1, %s4
  %s7 = scalar_select 0, %s6, %s4
  $region1: #{tpu_custom_call.1} parent=0
    #allocation2 [shape = 'u8[4096]{0}', space=vmem, size = 0x1000, scoped, tag = 'input window, operand 0, single buffered']
    #allocation3 [shape = 's32[1]{0}', space=sflag, size = 0x4, scoped, tag = 'scoped memory for tpu_custom_call.1']
    #allocation4 [shape = 's32[1]{0}', space=sflag, size = 0x4, scoped, tag = 'scoped memory for tpu_custom_call.1']
    #allocation5 [shape = 'u8[4096]{0}', space=vmem, size = 0x1000, scoped, tag = 'input window, operand 1, single buffered']
    #allocation6 [shape = 's32[1]{0}', space=sflag, size = 0x4, scoped, tag = 'scoped memory for tpu_custom_call.1']
    #allocation7 [shape = 'u8[4096]{0}', space=vmem, size = 0x1000, scoped, tag = 'output window, operand 0, single buffered']
    %8 = vsyncpa [#allocation3], 0
    %9 = vsyncpa [#allocation6], 0
    %10 = vsyncpa [#allocation4], 0
    // Predicated region
    $region2: #{tpu_custom_call.1} parent=1 // pred_check
      _
    $region3: #{tpu_custom_call.1} parent=1 // pred_check_branch
      %12 = sbr.rel (0) target = $region5
    $region4: #{tpu_custom_call.1} parent=1 // pred_region
      %s14 = ssub.s32 128, 128
      %15 = vsyncadd [#allocation3], %s14
      %s17 = sshll.u32 [#allocation2], 4
      %s18 = int_to_ptr.vmem [resolvable:$true] %s17
      %20 = dma.hbm_to_vmem [thread:$0]  %s0, 128, %s18, [#allocation3]
    $region5: #{tpu_custom_call.1} parent=1 // pred_fallthru
      _
    // Predicated region
    $region6: #{tpu_custom_call.1} parent=1 // pred_check
      _
    $region7: #{tpu_custom_call.1} parent=1 // pred_check_branch
      %22 = sbr.rel (0) target = $region9
    $region8: #{tpu_custom_call.1} parent=1 // pred_region
      %s24 = ssub.s32 128, 128
      %25 = vsyncadd [#allocation6], %s24
      %s27 = sshll.u32 [#allocation5], 4
      %s28 = int_to_ptr.vmem [resolvable:$true] %s27
      %30 = dma.hbm_to_vmem [thread:$0]  %s1, 128, %s28, [#allocation6]
    $region9: #{tpu_custom_call.1} parent=1 // pred_fallthru
      _
    // Predicated region
    $region10: #{tpu_custom_call.1} parent=1 // pred_check
      _
    $region11: #{tpu_custom_call.1} parent=1 // pred_check_branch
      %32 = sbr.rel (0) target = $region13
    $region12: #{tpu_custom_call.1} parent=1 // pred_region
      _
    $region13: #{tpu_custom_call.1} parent=1 // pred_fallthru
      _
    // Predicated region
    $region14: #{tpu_custom_call.1} parent=1 // pred_check
      _
    $region15: #{tpu_custom_call.1} parent=1 // pred_check_branch
      %34 = sbr.rel (0) target = $region17
    $region16: #{tpu_custom_call.1} parent=1 // pred_region
      %35 = dma.done [#allocation3], 128
    $region17: #{tpu_custom_call.1} parent=1 // pred_fallthru
      _
    // Predicated region
    $region18: #{tpu_custom_call.1} parent=1 // pred_check
      _
    $region19: #{tpu_custom_call.1} parent=1 // pred_check_branch
      %37 = sbr.rel (0) target = $region21
    $region20: #{tpu_custom_call.1} parent=1 // pred_region
      %38 = dma.done [#allocation6], 128
    $region21: #{tpu_custom_call.1} parent=1 // pred_fallthru
      _
    %p39 = scmp.eq.s32.totalorder 0, 0
    // Predicated region
    $region22: #{tpu_custom_call.1} parent=1 // pred_check
      %p40 = pneg %p39
    $region23: #{tpu_custom_call.1} parent=1 // pred_check_branch
      %42 = sbr.rel (%p40) target = $region25
    $region24: #{tpu_custom_call.1} parent=1 // pred_region
      %43 = vst [vmem:[#allocation7] sm:$0xff] 0.0
    $region25: #{tpu_custom_call.1} parent=1 // pred_fallthru
      _
    %v44 = vld [vmem:[#allocation2] sm:$0xff]
    %v45 = vld [vmem:[#allocation5] sm:$0xff]
    %v46 = vsub.f32 %v44, %v45
    %s47 = smul.u32 0, 128
    %s48 = sshra.s32 %s47, 7
    %s49 = sand.u32 %s47, 127
    %s50 = scalar_lea.vmem %s2, %s48
    %v51 = vld [vmem:[%s50] sm:$0x1]
    %v52 = vmul.f32 %v46, %v46
    %v54 = vlaneseq
    %v55 = vshrl.u32 %v54, 7
    %v56 = vsub.s32 0, %v55
    %v57 = vrot.slane %v51, %v56
    %v59 = vmul.f32 %v52, %v57
    %v60 = vld [vmem:[#allocation7] sm:$0xff]
    %v61 = vadd.f32 %v59, 0.0
    %v62 = vadd.f32 %v60, %v61
    %63 = vst [vmem:[#allocation7] sm:$0xff] %v62
    // Predicated region
    $region26: #{tpu_custom_call.1} parent=1 // pred_check
      _
    $region27: #{tpu_custom_call.1} parent=1 // pred_check_branch
      %65 = sbr.rel (0) target = $region29
    $region28: #{tpu_custom_call.1} parent=1 // pred_region
      %s67 = ssub.s32 128, 128
      %68 = vsyncadd [#allocation4], %s67
      %s70 = sshll.u32 [#allocation7], 4
      %s71 = int_to_ptr.vmem [resolvable:$true] %s70
      %73 = dma.vmem_to_hbm [thread:$0]  %s71, 128, %s3, [#allocation4]
    $region29: #{tpu_custom_call.1} parent=1 // pred_fallthru
      _
    // Predicated region
    $region30: #{tpu_custom_call.1} parent=1 // pred_check
      _
    $region31: #{tpu_custom_call.1} parent=1 // pred_check_branch
      %75 = sbr.rel (0) target = $region33
    $region32: #{tpu_custom_call.1} parent=1 // pred_region
      %76 = dma.done [#allocation4], 128
    $region33: #{tpu_custom_call.1} parent=1 // pred_fallthru
      _
    %77 = vsyncpa [#allocation3], 1
    %78 = vsyncpa [#allocation6], 1
    %79 = vsyncpa [#allocation4], 1

</llo_original>
